<compile_context>
chip_gen: v7x
topology: tpu7x:2x2x1
jax: 0.10.0
libtpu: 0.0.40
codegen_flags: <defaults>
</compile_context>

<pallas_src>
import functools

import jax
import jax.numpy as jnp
from jax.experimental import pallas as pl
from jax.experimental.pallas import tpu as pltpu

_LANES = 128
_DEFAULT_BLOCK_BYTES = 4 * 1024 * 1024   # ~4 MiB of data per grid step
_MAX_BLOCK_BYTES = 12 * 1024 * 1024      # 4x double-buffered -> <=48 MiB (v7x: 64 MiB VMEM)


def _cust_sigmoid_kernel(x_ref, o_ref, *, alpha, beta):
    # sigmoid(a*(x+b)) == 0.5 * tanh(a*(x+b)/2) + 0.5
    # Single EUP tanh + a few VALU ops; compute in f32 for accuracy.
    t = x_ref[...].astype(jnp.float32) + beta
    y = 0.5 * jnp.tanh((0.5 * alpha) * t) + 0.5
    o_ref[...] = y.astype(o_ref.dtype)


def cust_sigmoid_ref(x, alpha=10.0, beta=0.5):
    xf = x.astype(jnp.float32)
    return (1.0 / (1.0 + jnp.exp(-alpha * (xf + beta)))).astype(x.dtype)


def _tensorcores_per_chip():
    """Best-effort TensorCore count per chip; defaults to 1 if unknown."""
    try:
        info = pltpu.get_tpu_info()
        for attr in ("num_tensorcores", "tensorcore_count", "num_cores",
                     "cores_per_chip", "core_count"):
            v = getattr(info, attr, None)
            if isinstance(v, int) and v > 0:
                return v
    except Exception:
        pass
    try:
        kind = jax.devices()[0].device_kind.lower()
        if "v7" in kind:
            return 2
    except Exception:
        pass
    return 1


def _sublane_packing(itemsize):
    # Sub-32-bit dtypes pack along sublanes: f32 -> 8, bf16 -> 16, 8-bit -> 32.
    return max(8, 8 * (4 // max(1, int(itemsize))))


def cust_sigmoid(x, alpha=10.0, beta=0.5, *,
                 target_block_bytes=_DEFAULT_BLOCK_BYTES,
                 min_size_for_kernel=64 * 1024):
    """Elementwise custom sigmoid. Accepts any shape / dtype (ints promoted)."""
    orig_shape = x.shape
    if not jnp.issubdtype(x.dtype, jnp.floating):
        # Match torch's float promotion for non-float inputs.
        x = x.astype(jnp.float32)
    out_dtype = x.dtype
    n = x.size

    # Small-tensor fast path: launch overhead + layout plumbing would dominate.
    if n < min_size_for_kernel:
        return cust_sigmoid_ref(x, alpha, beta)

    alpha = float(alpha)
    beta = float(beta)
    itemsize = int(jnp.dtype(out_dtype).itemsize)
    packing = _sublane_packing(itemsize)

    # 128-aligned prefix goes through the kernel; the tiny (<128 elements)
    # tail is handled by plain XLA.  No full-tensor pad / slice-back.
    flat = jnp.ravel(x)
    n_main = (n // _LANES) * _LANES
    rows = n_main // _LANES
    if rows < packing:
        return cust_sigmoid_ref(x, alpha, beta)

    main = flat if n_main == n else flat[:n_main]
    slab = main.reshape(rows, _LANES)

    # dtype-aware block size: constant bytes per step, packing-aligned rows.
    block_bytes = min(int(target_block_bytes), _MAX_BLOCK_BYTES)
    tile_rows = max(packing,
                    (block_bytes // (_LANES * itemsize)) // packing * packing)
    tr = min(tile_rows, rows)
    tr = max(packing, (tr // packing) * packing)

    # On multi-TensorCore chips (v7x) make sure each core gets >= 2 blocks so
    # its pipeline can double-buffer.  On single-core chips (v5e/v6e) a forced
    # split is pure per-step overhead, so skip it.
    cores = _tensorcores_per_chip()
    if cores >= 2:
        min_steps = 2 * cores
        split_tr = ((rows // min_steps) // packing) * packing
        if split_tr >= packing:
            tr = min(tr, split_tr)

    grid = pl.cdiv(rows, tr)
    actual_block_bytes = tr * _LANES * itemsize
    vmem_limit = int(min(48 * 1024 * 1024,
                         max(32 * 1024 * 1024, 6 * actual_block_bytes)))

    kernel = functools.partial(_cust_sigmoid_kernel, alpha=alpha, beta=beta)

    out_slab = pl.pallas_call(
        kernel,
        out_shape=jax.ShapeDtypeStruct((rows, _LANES), out_dtype),
        grid_spec=pltpu.PrefetchScalarGridSpec(
            num_scalar_prefetch=0,
            grid=(grid,),
            in_specs=[pl.BlockSpec((tr, _LANES), lambda i: (i, 0))],
            out_specs=pl.BlockSpec((tr, _LANES), lambda i: (i, 0)),
        ),
        compiler_params=pltpu.CompilerParams(
            dimension_semantics=("parallel",),
            vmem_limit_bytes=vmem_limit,
        ),
        cost_estimate=pl.CostEstimate(
            flops=4 * rows * _LANES,
            transcendentals=rows * _LANES,
            bytes_accessed=2 * rows * _LANES * itemsize,
        ),
    )(slab)

    out_flat = out_slab.reshape(-1)
    if n_main != n:
        tail = flat[n_main:]
        out_flat = jnp.concatenate([out_flat,
                                    cust_sigmoid_ref(tail, alpha, beta)])
    return out_flat.reshape(orig_shape)


if __name__ == "__main__":
    key = jax.random.PRNGKey(0)
    k1, k2, k3 = jax.random.split(key, 3)

    # 1) Small NCHW input (PyTorch convention); force the Pallas path so the
    #    kernel itself is exercised (size multiple of 128 -> copy-free slab).
    x1 = jax.random.normal(k1, (2, 4, 16, 16), dtype=jnp.float32)
    y1 = jax.block_until_ready(cust_sigmoid(x1, alpha=10.0, beta=0.5,
                                            min_size_for_kernel=0))
    assert y1.shape == x1.shape and y1.dtype == x1.dtype
    assert jnp.allclose(y1, cust_sigmoid_ref(x1), atol=1e-5, rtol=1e-5), \
        "mismatch vs reference (aligned path)"

    # 2) Ragged size (not a multiple of 128) exercises the prefix+tail path.
    x2 = jax.random.normal(k2, (3, 5, 7, 11), dtype=jnp.float32)
    y2 = jax.block_until_ready(cust_sigmoid(x2, alpha=10.0, beta=0.5,
                                            min_size_for_kernel=0))
    assert y2.shape == x2.shape and y2.dtype == x2.dtype
    assert jnp.allclose(y2, cust_sigmoid_ref(x2), atol=1e-5, rtol=1e-5), \
        "mismatch vs reference (ragged path)"

    # 3) bf16 input exercises the dtype-aware (16-row packing) tiling.
    x3 = jax.random.normal(k3, (2, 4, 16, 16), dtype=jnp.bfloat16)
    y3 = jax.block_until_ready(cust_sigmoid(x3, alpha=10.0, beta=0.5,
                                            min_size_for_kernel=0))
    assert y3.shape == x3.shape and y3.dtype == x3.dtype
    assert jnp.allclose(y3.astype(jnp.float32),
                        cust_sigmoid_ref(x3).astype(jnp.float32),
                        atol=2e-2, rtol=2e-2), \
        "mismatch vs reference (bf16 path)"

    # 4) Default call: small-tensor fast path (no kernel launch), same result.
    y4 = jax.block_until_ready(cust_sigmoid(x1))
    assert jnp.allclose(y4, cust_sigmoid_ref(x1), atol=1e-5, rtol=1e-5), \
        "mismatch vs reference (fast path)"

    print("KERNEL_OK")
</pallas_src>

<mosaic_0001>
module attributes {stable_mosaic.version = 11 : i64} {
  func.func @_cust_sigmoid_kernel(%arg0: i32, %arg1: memref<16x128xf32, #tpu.memory_space<vmem>>, %arg2: memref<16x128xf32, #tpu.memory_space<vmem>>) attributes {dimension_semantics = [#tpu.dimension_semantics<parallel>], iteration_bounds = array<i64: 1>, scalar_prefetch = 0 : i64, scratch_operands = 0 : i64, tpu.core_type = #tpu.core_type<tc>, window_params = [{transform_indices = @transform_0, window_bounds = array<i64: 16, 128>}, {transform_indices = @transform_1, window_bounds = array<i64: 16, 128>}]} {
    %c0 = arith.constant 0 : index
    %c0_0 = arith.constant 0 : index
    %0 = vector.load %arg1[%c0, %c0_0] : memref<16x128xf32, #tpu.memory_space<vmem>>, vector<16x128xf32>
    %cst = arith.constant 5.000000e-01 : f32
    %1 = vector.broadcast %cst : f32 to vector<16x128xf32>
    %2 = arith.addf %0, %1 : vector<16x128xf32>
    %cst_1 = arith.constant 5.000000e+00 : f32
    %3 = vector.broadcast %cst_1 : f32 to vector<16x128xf32>
    %4 = arith.mulf %3, %2 : vector<16x128xf32>
    %5 = math.tanh %4 : vector<16x128xf32>
    %cst_2 = arith.constant 5.000000e-01 : f32
    %6 = vector.broadcast %cst_2 : f32 to vector<16x128xf32>
    %7 = arith.mulf %6, %5 : vector<16x128xf32>
    %cst_3 = arith.constant 5.000000e-01 : f32
    %8 = vector.broadcast %cst_3 : f32 to vector<16x128xf32>
    %9 = arith.addf %7, %8 : vector<16x128xf32>
    %c0_4 = arith.constant 0 : index
    %c0_5 = arith.constant 0 : index
    %10 = vector.load %arg2[%c0_4, %c0_5] : memref<16x128xf32, #tpu.memory_space<vmem>>, vector<16x128xf32>
    tpu.vector_store %arg2[%c0_4, %c0_5], %9 {strides = array<i32>} : memref<16x128xf32, #tpu.memory_space<vmem>>, vector<16x128xf32>,
    return
  }
  func.func @transform_0(%arg0: i32) -> (i32, i32) {
    %c0_i32 = arith.constant 0 : i32
    %c0_i32_0 = arith.constant 0 : i32
    return %arg0, %c0_i32 : i32, i32
  }
  func.func @transform_1(%arg0: i32) -> (i32, i32) {
    %c0_i32 = arith.constant 0 : i32
    %c0_i32_0 = arith.constant 0 : i32
    return %arg0, %c0_i32 : i32, i32
  }
}

</mosaic_0001>

<llo_original>
// kernel: tpu_custom_call.1
$region0: #{tpu_custom_call.1}
  #allocation0 [shape = 'u32[]', space=smem, size = 0x4, offset = 0x4, fixed_abs, tag = 'smem constant byte address 0x4 - core index']
  #allocation1 [shape = 'u32[144,128]{1,0:T(1,128)}', space=vmem, size = 0x12000, scoped, tag = 'internal scratch']
  %s0 = inlined_call_operand.hbm [shape: f32[16,128], index: 0, kind: input, shape index: {}]
  %s1 = inlined_call_operand.hbm [shape: f32[16,128], index: 1, kind: output, shape index: {}]
  %s2 = sld [smem:[#allocation0]]
  $region18: #{tpu_custom_call.1} parent=0
    _
  %s4 = ssub.s32 1, %s2
  %s5 = scalar_select 0, %s4, %s2
  $region1: #{tpu_custom_call.1} parent=0
    #allocation2 [shape = 'u8[8192]{0}', space=vmem, size = 0x2000, scoped, tag = 'input window, operand 0, single buffered']
    #allocation3 [shape = 's32[1]{0}', space=sflag, size = 0x4, scoped, tag = 'scoped memory for tpu_custom_call.1']
    #allocation4 [shape = 's32[1]{0}', space=sflag, size = 0x4, scoped, tag = 'scoped memory for tpu_custom_call.1']
    #allocation5 [shape = 'u8[8192]{0}', space=vmem, size = 0x2000, scoped, tag = 'output window, operand 0, single buffered']
    %6 = vsyncpa [#allocation3], 0
    %7 = vsyncpa [#allocation4], 0
    // Predicated region
    $region2: #{tpu_custom_call.1} parent=1 // pred_check
      _
    $region3: #{tpu_custom_call.1} parent=1 // pred_check_branch
      %9 = sbr.rel (0) target = $region5
    $region4: #{tpu_custom_call.1} parent=1 // pred_region
      %s11 = ssub.s32 256, 256
      %12 = vsyncadd [#allocation3], %s11
      %s13 = sshll.u32 [#allocation2], 4
      %s14 = int_to_ptr.vmem [resolvable:$true] %s13
      %19 = dma.hbm_to_vmem [thread:$0]  %s0, 256, %s14, [#allocation3], 128, 128, 8
    $region5: #{tpu_custom_call.1} parent=1 // pred_fallthru
      _
    // Predicated region
    $region6: #{tpu_custom_call.1} parent=1 // pred_check
      _
    $region7: #{tpu_custom_call.1} parent=1 // pred_check_branch
      %21 = sbr.rel (0) target = $region9
    $region8: #{tpu_custom_call.1} parent=1 // pred_region
      %22 = dma.done [#allocation3], 256
    $region9: #{tpu_custom_call.1} parent=1 // pred_fallthru
      _
    %v23 = vld [vmem:[#allocation2] sm:$0xff]
    %v24 = vld [vmem:[#allocation2 + $0x8] sm:$0xff]
    %v25 = vadd.f32 %v23, 0.5
    %v26 = vadd.f32 %v24, 0.5
    %v27 = vmul.f32 %v25, 5.0
    %v28 = vmul.f32 %v26, 5.0
    %v29 = vtanh.pop %v27
    %v30 = vtanh.pop %v28
    %v31 = vmul.f32 %v29, 0.5
    %v32 = vmul.f32 %v30, 0.5
    %v33 = vadd.f32 %v31, 0.5
    %v34 = vadd.f32 %v32, 0.5
    %35 = vst [vmem:[#allocation5] sm:$0xff] %v33
    %36 = vst [vmem:[#allocation5 + $0x8] sm:$0xff] %v34
    // Predicated region
    $region10: #{tpu_custom_call.1} parent=1 // pred_check
      _
    $region11: #{tpu_custom_call.1} parent=1 // pred_check_branch
      %38 = sbr.rel (0) target = $region13
    $region12: #{tpu_custom_call.1} parent=1 // pred_region
      %s40 = ssub.s32 256, 256
      %41 = vsyncadd [#allocation4], %s40
      %s42 = sshll.u32 [#allocation5], 4
      %s43 = int_to_ptr.vmem [resolvable:$true] %s42
      %48 = dma.vmem_to_hbm [thread:$0]  %s43, 256, %s1, [#allocation4], 128, 128, 8
    $region13: #{tpu_custom_call.1} parent=1 // pred_fallthru
      _
    // Predicated region
    $region14: #{tpu_custom_call.1} parent=1 // pred_check
      _
    $region15: #{tpu_custom_call.1} parent=1 // pred_check_branch
      %50 = sbr.rel (0) target = $region17
    $region16: #{tpu_custom_call.1} parent=1 // pred_region
      %51 = dma.done [#allocation4], 256
    $region17: #{tpu_custom_call.1} parent=1 // pred_fallthru
      _
    %52 = vsyncpa [#allocation3], 1
    %53 = vsyncpa [#allocation4], 1

</llo_original>
